<compile_context>
chip_gen: v5e
topology: v5e:2x2
jax: 0.10.0
libtpu: 0.0.40
codegen_flags: <defaults>
</compile_context>

<pallas_src>
import jax
import jax.numpy as jnp
from jax.experimental import pallas as pl
from jax.experimental.pallas import tpu as pltpu


def _feat_classifier_kernel(x_ref, v_ref, s_ref, b_ref, o_ref):
    # x_ref: (TB, D) matmul dtype, v_ref: (Cp, D) matmul dtype,
    # s_ref: (1, Cp) f32 weight-norm scale, b_ref: (1, Cp) f32 bias, o_ref: (TB, Cp) f32.
    y = jax.lax.dot_general(
        x_ref[...], v_ref[...],
        dimension_numbers=(((1,), (1,)), ((), ())),   # 'bd,cd->bc', no transpose temp
        preferred_element_type=jnp.float32,
    )                                                  # (TB, Cp) f32 accumulation
    o_ref[...] = (y * s_ref[...] + b_ref[...]).astype(o_ref.dtype)


def feat_classifier_forward(x, v, g, b, *, block_b=128, matmul_dtype=jnp.bfloat16):
    """Weight-normalized Linear forward.

    x: (B, D) float32, v: (C, D) float32 (Linear weight_v), g: (C, 1) float32
    (weight_g), b: (C,) or (1, C) float32 bias. Returns (B, C) float32.
    Pass matmul_dtype=jnp.float32 for exact f32 MXU operands.
    """
    B, D = x.shape
    C = v.shape[0]

    # weight_norm scale hoisted out of the matmul (computed once, f32, EUP rsqrt):
    #   x @ (g*v/||v||)^T == (x @ v^T) * (g/||v||)^T
    v32 = v.astype(jnp.float32)
    sq_norm = jnp.sum(v32 * v32, axis=-1, keepdims=True)            # (C, 1)
    s = (g.reshape(C, 1).astype(jnp.float32) * jax.lax.rsqrt(sq_norm)).reshape(1, C)
    bias = b.reshape(1, C).astype(jnp.float32)

    # Lane-dense class padding (multiple of 128) and sublane/tile-aligned batch padding.
    Cp = pl.cdiv(C, 128) * 128
    TB = min(block_b, ((B + 7) // 8) * 8)
    Bp = pl.cdiv(B, TB) * TB

    x_p = jnp.pad(x, ((0, Bp - B), (0, 0))).astype(matmul_dtype)
    v_p = jnp.pad(v, ((0, Cp - C), (0, 0))).astype(matmul_dtype)
    s_p = jnp.pad(s, ((0, 0), (0, Cp - C)))      # padded scale = 0 -> padded cols = 0
    b_p = jnp.pad(bias, ((0, 0), (0, Cp - C)))

    out = pl.pallas_call(
        _feat_classifier_kernel,
        out_shape=jax.ShapeDtypeStruct((Bp, Cp), jnp.float32),
        grid=(Bp // TB,),
        in_specs=[
            pl.BlockSpec((TB, D), lambda i: (i, 0)),   # batch tile
            pl.BlockSpec((Cp, D), lambda i: (0, 0)),   # weights resident across batch
            pl.BlockSpec((1, Cp), lambda i: (0, 0)),   # (1, C) scale, lane-aligned
            pl.BlockSpec((1, Cp), lambda i: (0, 0)),   # (1, C) bias
        ],
        out_specs=pl.BlockSpec((TB, Cp), lambda i: (i, 0)),
        compiler_params=pltpu.CompilerParams(
            dimension_semantics=("parallel",),         # lets v7x shard batch on 2 TCs
        ),
    )(x_p, v_p, s_p, b_p)

    return out[:B, :C]


def init_params(key, class_num, bottleneck_dim):
    """Deterministic synthetic init mirroring the PyTorch module.

    - v (weight_v): xavier_normal_ equivalent (std = sqrt(2/(fan_in+fan_out)))
    - g (weight_g): row norms of v (weight_norm's wrap-time init), shape (C, 1)
    - bias: zeros, shape (C,)
    """
    kv, = jax.random.split(key, 1)
    std = (2.0 / (bottleneck_dim + class_num)) ** 0.5
    v = std * jax.random.normal(kv, (class_num, bottleneck_dim), dtype=jnp.float32)
    g = jnp.sqrt(jnp.sum(v * v, axis=-1, keepdims=True))            # (C, 1)
    b = jnp.zeros((class_num,), dtype=jnp.float32)
    return v, g, b


if __name__ == "__main__":
    class_num = 16
    bottleneck_dim = 256
    batch = 128   # batch >= 128 rows so the standalone head kernel isn't pure launch overhead

    key = jax.random.PRNGKey(0)
    kx, kp = jax.random.split(key)
    x = jax.random.normal(kx, (batch, bottleneck_dim), dtype=jnp.float32)
    v, g, b = init_params(kp, class_num, bottleneck_dim)

    out = feat_classifier_forward(x, v, g, b)
    out = jax.block_until_ready(out)

    # Pure-JAX f32 reference of the weight_norm Linear forward.
    w_ref = v * (g / jnp.sqrt(jnp.sum(v * v, axis=-1, keepdims=True)))
    ref = x @ w_ref.T + b.reshape(1, -1)

    assert out.shape == (batch, class_num)
    # bf16 MXU operands with f32 accumulation -> loose-ish tolerance vs full-f32 ref.
    assert jnp.allclose(out, ref, atol=3e-2, rtol=3e-2), float(jnp.max(jnp.abs(out - ref)))

    print("KERNEL_OK")
</pallas_src>

<mosaic_0001>
module attributes {stable_mosaic.version = 11 : i64} {
  func.func @_feat_classifier_kernel(%arg0: i32, %arg1: memref<128x256xbf16, #tpu.memory_space<vmem>>, %arg2: memref<128x256xbf16, #tpu.memory_space<vmem>>, %arg3: memref<1x128xf32, #tpu.memory_space<vmem>>, %arg4: memref<1x128xf32, #tpu.memory_space<vmem>>, %arg5: memref<128x128xf32, #tpu.memory_space<vmem>>) attributes {dimension_semantics = [#tpu.dimension_semantics<parallel>], iteration_bounds = array<i64: 1>, scalar_prefetch = 0 : i64, scratch_operands = 0 : i64, tpu.core_type = #tpu.core_type<tc>, window_params = [{transform_indices = @transform_0, window_bounds = array<i64: 128, 256>}, {pipeline_mode = #tpu.pipeline_mode<synchronous>, transform_indices = @transform_1, window_bounds = array<i64: 128, 256>}, {pipeline_mode = #tpu.pipeline_mode<synchronous>, transform_indices = @transform_2, window_bounds = array<i64: 1, 128>}, {pipeline_mode = #tpu.pipeline_mode<synchronous>, transform_indices = @transform_3, window_bounds = array<i64: 1, 128>}, {transform_indices = @transform_4, window_bounds = array<i64: 128, 128>}]} {
    %c0 = arith.constant 0 : index
    %c0_0 = arith.constant 0 : index
    %0 = vector.load %arg1[%c0, %c0_0] : memref<128x256xbf16, #tpu.memory_space<vmem>>, vector<128x256xbf16>
    %c0_1 = arith.constant 0 : index
    %c0_2 = arith.constant 0 : index
    %1 = vector.load %arg2[%c0_1, %c0_2] : memref<128x256xbf16, #tpu.memory_space<vmem>>, vector<128x256xbf16>
    %cst = arith.constant dense<0.000000e+00> : vector<128x128xf32>
    %2 = tpu.matmul %0, %1, %cst {dimension_numbers = #tpu.dot_dimension_numbers<[1], [1], [0], [0], [0, 0, 1, 0], [], []>} : vector<128x256xbf16>, vector<128x256xbf16>, vector<128x128xf32> -> vector<128x128xf32>
    %c0_3 = arith.constant 0 : index
    %c0_4 = arith.constant 0 : index
    %3 = vector.load %arg3[%c0_3, %c0_4] : memref<1x128xf32, #tpu.memory_space<vmem>>, vector<1x128xf32>
    %4 = vector.broadcast %3 : vector<1x128xf32> to vector<128x128xf32>
    %5 = arith.mulf %2, %4 : vector<128x128xf32>
    %c0_5 = arith.constant 0 : index
    %c0_6 = arith.constant 0 : index
    %6 = vector.load %arg4[%c0_5, %c0_6] : memref<1x128xf32, #tpu.memory_space<vmem>>, vector<1x128xf32>
    %7 = vector.broadcast %6 : vector<1x128xf32> to vector<128x128xf32>
    %8 = arith.addf %5, %7 : vector<128x128xf32>
    %c0_7 = arith.constant 0 : index
    %c0_8 = arith.constant 0 : index
    %9 = vector.load %arg5[%c0_7, %c0_8] : memref<128x128xf32, #tpu.memory_space<vmem>>, vector<128x128xf32>
    tpu.vector_store %arg5[%c0_7, %c0_8], %8 {strides = array<i32>} : memref<128x128xf32, #tpu.memory_space<vmem>>, vector<128x128xf32>,
    return
  }
  func.func @transform_0(%arg0: i32) -> (i32, i32) {
    %c0_i32 = arith.constant 0 : i32
    %c0_i32_0 = arith.constant 0 : i32
    return %arg0, %c0_i32 : i32, i32
  }
  func.func @transform_1(%arg0: i32) -> (i32, i32) {
    %c0_i32 = arith.constant 0 : i32
    %c0_i32_0 = arith.constant 0 : i32
    %c0_i32_1 = arith.constant 0 : i32
    return %c0_i32, %c0_i32_0 : i32, i32
  }
  func.func @transform_2(%arg0: i32) -> (i32, i32) {
    %c0_i32 = arith.constant 0 : i32
    %c0_i32_0 = arith.constant 0 : i32
    %c0_i32_1 = arith.constant 0 : i32
    return %c0_i32, %c0_i32_0 : i32, i32
  }
  func.func @transform_3(%arg0: i32) -> (i32, i32) {
    %c0_i32 = arith.constant 0 : i32
    %c0_i32_0 = arith.constant 0 : i32
    %c0_i32_1 = arith.constant 0 : i32
    return %c0_i32, %c0_i32_0 : i32, i32
  }
  func.func @transform_4(%arg0: i32) -> (i32, i32) {
    %c0_i32 = arith.constant 0 : i32
    %c0_i32_0 = arith.constant 0 : i32
    return %arg0, %c0_i32 : i32, i32
  }
}

</mosaic_0001>

<llo_original>
// kernel: tpu_custom_call.1
$region0: #{tpu_custom_call.1}
  #allocation0 [shape = 'u32[]', space=smem, size = 0x4, offset = 0x4, fixed_abs, tag = 'smem constant byte address 0x4 - core index']
  #allocation1 [shape = 'u32[72,128]{1,0:T(1,128)}', space=vmem, size = 0x9000, scoped, tag = 'internal scratch']
  %s0 = inlined_call_operand.hbm [shape: bf16[128,256], index: 0, kind: input, shape index: {}]
  %s1 = inlined_call_operand.hbm [shape: bf16[128,256], index: 1, kind: input, shape index: {}]
  %s2 = inlined_call_operand.vmem [shape: f32[1,128], index: 2, kind: input, shape index: {}]
  %s3 = inlined_call_operand.vmem [shape: f32[1,128], index: 3, kind: input, shape index: {}]
  %s4 = inlined_call_operand.hbm [shape: f32[128,128], index: 4, kind: output, shape index: {}]
  %s5 = sld [smem:[#allocation0]]
  $region34: #{tpu_custom_call.1} parent=0
    _
  %s7 = ssub.s32 1, %s5
  %s8 = scalar_select 0, %s7, %s5
  $region1: #{tpu_custom_call.1} parent=0
    #allocation2 [shape = 'u8[65536]{0}', space=vmem, size = 0x10000, scoped, tag = 'input window, operand 0, single buffered']
    #allocation3 [shape = 's32[1]{0}', space=sflag, size = 0x4, scoped, tag = 'scoped memory for tpu_custom_call.1']
    #allocation4 [shape = 's32[1]{0}', space=sflag, size = 0x4, scoped, tag = 'scoped memory for tpu_custom_call.1']
    #allocation5 [shape = 'u8[65536]{0}', space=vmem, size = 0x10000, scoped, tag = 'input window, operand 1, single buffered']
    #allocation6 [shape = 's32[1]{0}', space=sflag, size = 0x4, scoped, tag = 'scoped memory for tpu_custom_call.1']
    #allocation7 [shape = 'u8[65536]{0}', space=vmem, size = 0x10000, scoped, tag = 'output window, operand 0, single buffered']
    %9 = vsyncpa [#allocation3], 0
    %10 = vsyncpa [#allocation6], 0
    %11 = vsyncpa [#allocation4], 0
    // Predicated region
    $region2: #{tpu_custom_call.1} parent=1 // pred_check
      _
    $region3: #{tpu_custom_call.1} parent=1 // pred_check_branch
      %13 = sbr.rel (0) target = $region5
    $region4: #{tpu_custom_call.1} parent=1 // pred_region
      %15 = vsyncadd [#allocation3], 0
      %s16 = sshll.u32 %s0, 4
      %s17 = int_to_ptr.hbm [resolvable:$true] %s16
      %s18 = sshll.u32 [#allocation2], 4
      %s19 = int_to_ptr.vmem [resolvable:$true] %s18
      %24 = dma.hbm_to_vmem [thread:$0]  %s17, 2048, %s19, [#allocation3], 128, 128, 8
    $region5: #{tpu_custom_call.1} parent=1 // pred_fallthru
      _
    // Predicated region
    $region6: #{tpu_custom_call.1} parent=1 // pred_check
      _
    $region7: #{tpu_custom_call.1} parent=1 // pred_check_branch
      %26 = sbr.rel (0) target = $region9
    $region8: #{tpu_custom_call.1} parent=1 // pred_region
      %28 = vsyncadd [#allocation6], 0
      %s29 = sshll.u32 %s1, 4
      %s30 = int_to_ptr.hbm [resolvable:$true] %s29
      %s31 = sshll.u32 [#allocation5], 4
      %s32 = int_to_ptr.vmem [resolvable:$true] %s31
      %37 = dma.hbm_to_vmem [thread:$0]  %s30, 2048, %s32, [#allocation6], 128, 128, 8
    $region9: #{tpu_custom_call.1} parent=1 // pred_fallthru
      _
    // Predicated region
    $region10: #{tpu_custom_call.1} parent=1 // pred_check
      _
    $region11: #{tpu_custom_call.1} parent=1 // pred_check_branch
      %39 = sbr.rel (0) target = $region13
    $region12: #{tpu_custom_call.1} parent=1 // pred_region
      _
    $region13: #{tpu_custom_call.1} parent=1 // pred_fallthru
      _
    // Predicated region
    $region14: #{tpu_custom_call.1} parent=1 // pred_check
      _
    $region15: #{tpu_custom_call.1} parent=1 // pred_check_branch
      %41 = sbr.rel (0) target = $region17
    $region16: #{tpu_custom_call.1} parent=1 // pred_region
      _
    $region17: #{tpu_custom_call.1} parent=1 // pred_fallthru
      _
    // Predicated region
    $region18: #{tpu_custom_call.1} parent=1 // pred_check
      _
    $region19: #{tpu_custom_call.1} parent=1 // pred_check_branch
      %43 = sbr.rel (0) target = $region21
    $region20: #{tpu_custom_call.1} parent=1 // pred_region
      %45 = dma.done [#allocation3], 2048
    $region21: #{tpu_custom_call.1} parent=1 // pred_fallthru
      _
    // Predicated region
    $region22: #{tpu_custom_call.1} parent=1 // pred_check
      _
    $region23: #{tpu_custom_call.1} parent=1 // pred_check_branch
      %47 = sbr.rel (0) target = $region25
    $region24: #{tpu_custom_call.1} parent=1 // pred_region
      %49 = dma.done [#allocation6], 2048
    $region25: #{tpu_custom_call.1} parent=1 // pred_fallthru
      _
    %v50 = vld [vmem:[#allocation2] sm:$0xff]
    %v51 = vld [vmem:[#allocation2 + $0x8] sm:$0xff]
    %v52 = vld [vmem:[#allocation2 + $0x10] sm:$0xff]
    %v53 = vld [vmem:[#allocation2 + $0x18] sm:$0xff]
    %v54 = vld [vmem:[#allocation2 + $0x20] sm:$0xff]
    %v55 = vld [vmem:[#allocation2 + $0x28] sm:$0xff]
    %v56 = vld [vmem:[#allocation2 + $0x30] sm:$0xff]
    %v57 = vld [vmem:[#allocation2 + $0x38] sm:$0xff]
    %v58 = vld [vmem:[#allocation2 + $0x40] sm:$0xff]
    %v59 = vld [vmem:[#allocation2 + $0x48] sm:$0xff]
    %v60 = vld [vmem:[#allocation2 + $0x50] sm:$0xff]
    %v61 = vld [vmem:[#allocation2 + $0x58] sm:$0xff]
    %v62 = vld [vmem:[#allocation2 + $0x60] sm:$0xff]
    %v63 = vld [vmem:[#allocation2 + $0x68] sm:$0xff]
    %v64 = vld [vmem:[#allocation2 + $0x70] sm:$0xff]
    %v65 = vld [vmem:[#allocation2 + $0x78] sm:$0xff]
    %v66 = vld [vmem:[#allocation5] sm:$0xff]
    %v67 = vld [vmem:[#allocation5 + $0x8] sm:$0xff]
    %v68 = vld [vmem:[#allocation5 + $0x10] sm:$0xff]
    %v69 = vld [vmem:[#allocation5 + $0x18] sm:$0xff]
    %v70 = vld [vmem:[#allocation5 + $0x20] sm:$0xff]
    %v71 = vld [vmem:[#allocation5 + $0x28] sm:$0xff]
    %v72 = vld [vmem:[#allocation5 + $0x30] sm:$0xff]
    %v73 = vld [vmem:[#allocation5 + $0x38] sm:$0xff]
    %v74 = vld [vmem:[#allocation5 + $0x40] sm:$0xff]
    %v75 = vld [vmem:[#allocation5 + $0x48] sm:$0xff]
    %v76 = vld [vmem:[#allocation5 + $0x50] sm:$0xff]
    %v77 = vld [vmem:[#allocation5 + $0x58] sm:$0xff]
    %v78 = vld [vmem:[#allocation5 + $0x60] sm:$0xff]
    %v79 = vld [vmem:[#allocation5 + $0x68] sm:$0xff]
    %v80 = vld [vmem:[#allocation5 + $0x70] sm:$0xff]
    %v81 = vld [vmem:[#allocation5 + $0x78] sm:$0xff]
    %v98 = vunpack.c.l.b16 %v50
    %v99 = vunpack.c.h.b16 %v50
    %v100 = vunpack.c.l.b16 %v51
    %v101 = vunpack.c.h.b16 %v51
    %v102 = vunpack.c.l.b16 %v52
    %v103 = vunpack.c.h.b16 %v52
    %v104 = vunpack.c.l.b16 %v53
    %v105 = vunpack.c.h.b16 %v53
    %v106 = vunpack.c.l.b16 %v54
    %v107 = vunpack.c.h.b16 %v54
    %v108 = vunpack.c.l.b16 %v55
    %v109 = vunpack.c.h.b16 %v55
    %v110 = vunpack.c.l.b16 %v56
    %v111 = vunpack.c.h.b16 %v56
    %v112 = vunpack.c.l.b16 %v57
    %v113 = vunpack.c.h.b16 %v57
    %v114 = vunpack.c.l.b16 %v58
    %v115 = vunpack.c.h.b16 %v58
    %v116 = vunpack.c.l.b16 %v59
    %v117 = vunpack.c.h.b16 %v59
    %v118 = vunpack.c.l.b16 %v60
    %v119 = vunpack.c.h.b16 %v60
    %v120 = vunpack.c.l.b16 %v61
    %v121 = vunpack.c.h.b16 %v61
    %v122 = vunpack.c.l.b16 %v62
    %v123 = vunpack.c.h.b16 %v62
    %v124 = vunpack.c.l.b16 %v63
    %v125 = vunpack.c.h.b16 %v63
    %v126 = vunpack.c.l.b16 %v64
    %v127 = vunpack.c.h.b16 %v64
    %v128 = vunpack.c.l.b16 %v65
    %v129 = vunpack.c.h.b16 %v65
    %v130 = vpack.c.b16 %v100, %v98
    %v131 = vpack.c.b16 %v101, %v99
    %v132 = vpack.c.b16 %v104, %v102
    %v133 = vpack.c.b16 %v105, %v103
    %v134 = vpack.c.b16 %v108, %v106
    %v135 = vpack.c.b16 %v109, %v107
    %v136 = vpack.c.b16 %v112, %v110
    %v137 = vpack.c.b16 %v113, %v111
    %v138 = vpack.c.b16 %v116, %v114
    %v139 = vpack.c.b16 %v117, %v115
    %v140 = vpack.c.b16 %v120, %v118
    %v141 = vpack.c.b16 %v121, %v119
    %v142 = vpack.c.b16 %v124, %v122
    %v143 = vpack.c.b16 %v125, %v123
    %v144 = vpack.c.b16 %v128, %v126
    %v145 = vpack.c.b16 %v129, %v127
    %v178 = vunpack.c.l.b16 %v66
    %v179 = vunpack.c.h.b16 %v66
    %v180 = vunpack.c.l.b16 %v67
    %v181 = vunpack.c.h.b16 %v67
    %v182 = vunpack.c.l.b16 %v68
    %v183 = vunpack.c.h.b16 %v68
    %v184 = vunpack.c.l.b16 %v69
    %v185 = vunpack.c.h.b16 %v69
    %v186 = vunpack.c.l.b16 %v70
    %v187 = vunpack.c.h.b16 %v70
    %v188 = vunpack.c.l.b16 %v71
    %v189 = vunpack.c.h.b16 %v71
    %v190 = vunpack.c.l.b16 %v72
    %v191 = vunpack.c.h.b16 %v72
    %v192 = vunpack.c.l.b16 %v73
    %v193 = vunpack.c.h.b16 %v73
    %v194 = vunpack.c.l.b16 %v74
    %v195 = vunpack.c.h.b16 %v74
    %v196 = vunpack.c.l.b16 %v75
    %v197 = vunpack.c.h.b16 %v75
    %v198 = vunpack.c.l.b16 %v76
    %v199 = vunpack.c.h.b16 %v76
    %v200 = vunpack.c.l.b16 %v77
    %v201 = vunpack.c.h.b16 %v77
    %v202 = vunpack.c.l.b16 %v78
    %v203 = vunpack.c.h.b16 %v78
    %v204 = vunpack.c.l.b16 %v79
    %v205 = vunpack.c.h.b16 %v79
    %v206 = vunpack.c.l.b16 %v80
    %v207 = vunpack.c.h.b16 %v80
    %v208 = vunpack.c.l.b16 %v81
    %v209 = vunpack.c.h.b16 %v81
    %v210 = vpack.c.b16 %v180, %v178
    %v211 = vpack.c.b16 %v181, %v179
    %v212 = vpack.c.b16 %v184, %v182
    %v213 = vpack.c.b16 %v185, %v183
    %v214 = vpack.c.b16 %v188, %v186
    %v215 = vpack.c.b16 %v189, %v187
    %v216 = vpack.c.b16 %v192, %v190
    %v217 = vpack.c.b16 %v193, %v191
    %v218 = vpack.c.b16 %v196, %v194
    %v219 = vpack.c.b16 %v197, %v195
    %v220 = vpack.c.b16 %v200, %v198
    %v221 = vpack.c.b16 %v201, %v199
    %v222 = vpack.c.b16 %v204, %v202
    %v223 = vpack.c.b16 %v205, %v203
    %v224 = vpack.c.b16 %v208, %v206
    %v225 = vpack.c.b16 %v209, %v207
    %242 = vmatpush.bf16.xpose.msra.mxu0 %v224
    %243 = vmatpush.bf16.xpose.msra.mxu0 %v222
    %244 = vmatpush.bf16.xpose.msra.mxu0 %v220
    %245 = vmatpush.bf16.xpose.msra.mxu0 %v218
    %246 = vmatpush.bf16.xpose.msra.mxu0 %v216
    %247 = vmatpush.bf16.xpose.msra.mxu0 %v214
    %248 = vmatpush.bf16.xpose.msra.mxu0 %v212
    %249 = vmatpush.bf16.xpose.msra.mxu0 %v210
    %250 = vmatmul.bf16.gmra.mxu0 %v130
    %v251 = vpop.f32.mrf.mxu0
    %v252 = vadd.f32 0.0, %v251
    %v253 = vpop.f32.mrf.mxu0
    %v254 = vadd.f32 0.0, %v253
    %255 = vmatmul.bf16.gmra.mxu0 %v132
    %v256 = vpop.f32.mrf.mxu0
    %v257 = vadd.f32 0.0, %v256
    %v258 = vpop.f32.mrf.mxu0
    %v259 = vadd.f32 0.0, %v258
    %260 = vmatmul.bf16.gmra.mxu0 %v134
    %v261 = vpop.f32.mrf.mxu0
    %v262 = vadd.f32 0.0, %v261
    %v263 = vpop.f32.mrf.mxu0
    %v264 = vadd.f32 0.0, %v263
    %265 = vmatmul.bf16.gmra.mxu0 %v136
    %v266 = vpop.f32.mrf.mxu0
    %v267 = vadd.f32 0.0, %v266
    %v268 = vpop.f32.mrf.mxu0
    %v269 = vadd.f32 0.0, %v268
    %270 = vmatmul.bf16.gmra.mxu0 %v138
    %v271 = vpop.f32.mrf.mxu0
    %v272 = vadd.f32 0.0, %v271
    %v273 = vpop.f32.mrf.mxu0
    %v274 = vadd.f32 0.0, %v273
    %275 = vmatmul.bf16.gmra.mxu0 %v140
    %v276 = vpop.f32.mrf.mxu0
    %v277 = vadd.f32 0.0, %v276
    %v278 = vpop.f32.mrf.mxu0
    %v279 = vadd.f32 0.0, %v278
    %280 = vmatmul.bf16.gmra.mxu0 %v142
    %v281 = vpop.f32.mrf.mxu0
    %v282 = vadd.f32 0.0, %v281
    %v283 = vpop.f32.mrf.mxu0
    %v284 = vadd.f32 0.0, %v283
    %285 = vmatmul.bf16.gmra.mxu0 %v144
    %v286 = vpop.f32.mrf.mxu0
    %v287 = vadd.f32 0.0, %v286
    %v288 = vpop.f32.mrf.mxu0
    %v289 = vadd.f32 0.0, %v288
    %290 = vdwg.mxu0
    %291 = vmatpush.bf16.xpose.msra.mxu0 %v225
    %292 = vmatpush.bf16.xpose.msra.mxu0 %v223
    %293 = vmatpush.bf16.xpose.msra.mxu0 %v221
    %294 = vmatpush.bf16.xpose.msra.mxu0 %v219
    %295 = vmatpush.bf16.xpose.msra.mxu0 %v217
    %296 = vmatpush.bf16.xpose.msra.mxu0 %v215
    %297 = vmatpush.bf16.xpose.msra.mxu0 %v213
    %298 = vmatpush.bf16.xpose.msra.mxu0 %v211
    %299 = vmatmul.bf16.gmra.mxu0 %v131
    %v300 = vpop.f32.mrf.mxu0
    %v301 = vadd.f32 %v252, %v300
    %v302 = vpop.f32.mrf.mxu0
    %v303 = vadd.f32 %v254, %v302
    %304 = vmatmul.bf16.gmra.mxu0 %v133
    %v305 = vpop.f32.mrf.mxu0
    %v306 = vadd.f32 %v257, %v305
    %v307 = vpop.f32.mrf.mxu0
    %v308 = vadd.f32 %v259, %v307
    %309 = vmatmul.bf16.gmra.mxu0 %v135
    %v310 = vpop.f32.mrf.mxu0
    %v311 = vadd.f32 %v262, %v310
    %v312 = vpop.f32.mrf.mxu0
    %v313 = vadd.f32 %v264, %v312
    %314 = vmatmul.bf16.gmra.mxu0 %v137
    %v315 = vpop.f32.mrf.mxu0
    %v316 = vadd.f32 %v267, %v315
    %v317 = vpop.f32.mrf.mxu0
    %v318 = vadd.f32 %v269, %v317
    %319 = vmatmul.bf16.gmra.mxu0 %v139
    %v320 = vpop.f32.mrf.mxu0
    %v321 = vadd.f32 %v272, %v320
    %v322 = vpop.f32.mrf.mxu0
    %v323 = vadd.f32 %v274, %v322
    %324 = vmatmul.bf16.gmra.mxu0 %v141
    %v325 = vpop.f32.mrf.mxu0
    %v326 = vadd.f32 %v277, %v325
    %v327 = vpop.f32.mrf.mxu0
    %v328 = vadd.f32 %v279, %v327
    %329 = vmatmul.bf16.gmra.mxu0 %v143
    %v330 = vpop.f32.mrf.mxu0
    %v331 = vadd.f32 %v282, %v330
    %v332 = vpop.f32.mrf.mxu0
    %v333 = vadd.f32 %v284, %v332
    %334 = vmatmul.bf16.gmra.mxu0 %v145
    %v335 = vpop.f32.mrf.mxu0
    %v336 = vadd.f32 %v287, %v335
    %v337 = vpop.f32.mrf.mxu0
    %v338 = vadd.f32 %v289, %v337
    %339 = vdwg.mxu0
    %v340 = vld [vmem:[%s2] sm:$0x1]
    %v342 = vperm.slane %v340, 0
    %v344 = vmul.f32 %v301, %v342
    %v345 = vmul.f32 %v303, %v342
    %v346 = vmul.f32 %v306, %v342
    %v347 = vmul.f32 %v308, %v342
    %v348 = vmul.f32 %v311, %v342
    %v349 = vmul.f32 %v313, %v342
    %v350 = vmul.f32 %v316, %v342
    %v351 = vmul.f32 %v318, %v342
    %v352 = vmul.f32 %v321, %v342
    %v353 = vmul.f32 %v323, %v342
    %v354 = vmul.f32 %v326, %v342
    %v355 = vmul.f32 %v328, %v342
    %v356 = vmul.f32 %v331, %v342
    %v357 = vmul.f32 %v333, %v342
    %v358 = vmul.f32 %v336, %v342
    %v359 = vmul.f32 %v338, %v342
    %v360 = vld [vmem:[%s3] sm:$0x1]
    %v362 = vperm.slane %v360, 0
    %v364 = vadd.f32 %v344, %v362
    %v365 = vadd.f32 %v345, %v362
    %v366 = vadd.f32 %v346, %v362
    %v367 = vadd.f32 %v347, %v362
    %v368 = vadd.f32 %v348, %v362
    %v369 = vadd.f32 %v349, %v362
    %v370 = vadd.f32 %v350, %v362
    %v371 = vadd.f32 %v351, %v362
    %v372 = vadd.f32 %v352, %v362
    %v373 = vadd.f32 %v353, %v362
    %v374 = vadd.f32 %v354, %v362
    %v375 = vadd.f32 %v355, %v362
    %v376 = vadd.f32 %v356, %v362
    %v377 = vadd.f32 %v357, %v362
    %v378 = vadd.f32 %v358, %v362
    %v379 = vadd.f32 %v359, %v362
    %380 = vst [vmem:[#allocation7] sm:$0xff] %v364
    %381 = vst [vmem:[#allocation7 + $0x8] sm:$0xff] %v365
    %382 = vst [vmem:[#allocation7 + $0x10] sm:$0xff] %v366
    %383 = vst [vmem:[#allocation7 + $0x18] sm:$0xff] %v367
    %384 = vst [vmem:[#allocation7 + $0x20] sm:$0xff] %v368
    %385 = vst [vmem:[#allocation7 + $0x28] sm:$0xff] %v369
    %386 = vst [vmem:[#allocation7 + $0x30] sm:$0xff] %v370
    %387 = vst [vmem:[#allocation7 + $0x38] sm:$0xff] %v371
    %388 = vst [vmem:[#allocation7 + $0x40] sm:$0xff] %v372
    %389 = vst [vmem:[#allocation7 + $0x48] sm:$0xff] %v373
    %390 = vst [vmem:[#allocation7 + $0x50] sm:$0xff] %v374
    %391 = vst [vmem:[#allocation7 + $0x58] sm:$0xff] %v375
    %392 = vst [vmem:[#allocation7 + $0x60] sm:$0xff] %v376
    %393 = vst [vmem:[#allocation7 + $0x68] sm:$0xff] %v377
    %394 = vst [vmem:[#allocation7 + $0x70] sm:$0xff] %v378
    %395 = vst [vmem:[#allocation7 + $0x78] sm:$0xff] %v379
    // Predicated region
    $region26: #{tpu_custom_call.1} parent=1 // pred_check
      _
    $region27: #{tpu_custom_call.1} parent=1 // pred_check_branch
      %397 = sbr.rel (0) target = $region29
    $region28: #{tpu_custom_call.1} parent=1 // pred_region
      %399 = vsyncadd [#allocation4], 0
      %s400 = sshll.u32 [#allocation7], 4
      %s401 = int_to_ptr.vmem [resolvable:$true] %s400
      %s402 = sshll.u32 %s4, 4
      %s403 = int_to_ptr.hbm [resolvable:$true] %s402
      %408 = dma.vmem_to_hbm [thread:$0]  %s401, 2048, %s403, [#allocation4], 128, 128, 8
    $region29: #{tpu_custom_call.1} parent=1 // pred_fallthru
      _
    // Predicated region
    $region30: #{tpu_custom_call.1} parent=1 // pred_check
      _
    $region31: #{tpu_custom_call.1} parent=1 // pred_check_branch
      %410 = sbr.rel (0) target = $region33
    $region32: #{tpu_custom_call.1} parent=1 // pred_region
      %412 = dma.done [#allocation4], 2048
    $region33: #{tpu_custom_call.1} parent=1 // pred_fallthru
      _
    %413 = vsyncpa [#allocation3], 1
    %414 = vsyncpa [#allocation6], 1
    %415 = vsyncpa [#allocation4], 1

</llo_original>
